<compile_context>
chip_gen: v7x
topology: tpu7x:2x2x1
jax: 0.10.0
libtpu: 0.0.40
codegen_flags: <defaults>
</compile_context>

<pallas_src>
import functools

import jax
import jax.numpy as jnp
from jax.experimental import pallas as pl
from jax.experimental.pallas import tpu as pltpu

LABEL_SMOOTHING = 0.1
_SUBLANE = 16  # row rounding: multiple of 8, matches the bf16 (16,128) packed tile


def _mil_ce_kernel(logits_ref, targets_ref, out_ref, *, n_total: int):
    # logits_ref: (TILE_N, C) | targets_ref: (TILE_N, 1) int32
    # out_ref:    (1, 128) f32 -> this tile's loss sum broadcast to all lanes
    x = logits_ref[...].astype(jnp.float32)                       # (T, C) f32
    t = targets_ref[...]                                          # (T, 1) i32
    tile_n, c = x.shape
    eps = LABEL_SMOOTHING

    # numerically-stable log-sum-exp along the class (lane) axis
    m = jnp.max(x, axis=-1, keepdims=True)                        # (T, 1)
    z = x - m                                                     # (T, C)
    lse = jnp.log(jnp.sum(jnp.exp(z), axis=-1, keepdims=True))    # (T, 1)

    # fused smoothed cross-entropy (single weighted lane reduction instead of
    # separate z_target / sum_z passes):
    #   w_c  = eps/C + (1-eps) * [c == t]
    #   loss = lse - sum_c w_c * z_c
    col = jax.lax.broadcasted_iota(jnp.int32, (tile_n, c), 1)     # (T, C)
    w = jnp.where(col == t, (1.0 - eps) + eps / c, eps / c)       # (T, C) f32
    per_row = lse - jnp.sum(w * z, axis=-1, keepdims=True)        # (T, 1)
    # TODO(synk): on v7x / bf16-fed v6e the two lane reductions above could be
    # offloaded to the otherwise-idle MXU (dot against ones((C, 1), f32)) if
    # the kernel ever profiles VALU-bound; at these class counts it stays
    # HBM-bound so the VPU/XLU path is kept.

    # Mask rows of the last (partial) tile beyond the true batch size.
    # NOTE: this must stay a select (jnp.where): garbage/NaN/Inf in padded
    # rows is discarded by the select and never propagates into tile_sum.
    # Do not refactor into a multiply-by-mask.
    row = jax.lax.broadcasted_iota(jnp.int32, (tile_n, 1), 0)
    valid = (pl.program_id(0) * tile_n + row) < n_total
    per_row = jnp.where(valid, per_row, 0.0)

    tile_sum = jnp.sum(per_row)                                   # scalar f32
    # lane-dense, unmasked store: broadcast to all 128 lanes; wrapper /128.
    out_ref[...] = jnp.full((1, 128), tile_sum, dtype=jnp.float32)


def _chip_vmem_config():
    """(tile working-set budget, scoped vmem_limit_bytes) for this chip."""
    try:
        phys = int(pltpu.get_tpu_info().vmem_capacity_bytes)
    except Exception:
        phys = 64 << 20                    # unknown: assume smallest (v7x-class)
    if phys > (96 << 20):                  # v5e / v6e: 128 MiB VMEM per TC
        return 56 << 20, 96 << 20
    return 28 << 20, 48 << 20              # v7x: 64 MiB physical per TC


def _bytes_per_row(c: int, itemsize: int) -> int:
    """Conservative per-row VMEM working-set estimate for one tile."""
    logits = 2 * c * itemsize              # input tile, double-buffered DMA
    temps = 5 * c * 4                      # f32 upcast / z / exp(z) / w / w*z
    targets = 2 * 128 * 4                  # (T,1) i32 lane-pads to (T,128), 2 bufs
    return logits + temps + targets


def _pick_tile_n(n: int, c: int, itemsize: int, vmem_budget: int,
                 *, target_tile_bytes: int = 4 << 20, max_rows: int = 8192) -> int:
    """Pick the row-tile size.

    As large as the ~4 MiB HBM-streaming sweet spot and the VMEM budget allow
    (capped at 8192 rows), rounded to 16 rows (bf16 sublane packing), and --
    whenever N is large enough -- split into >=2 balanced grid steps with an
    even step count so the "parallel" grid axis shards across both v7x TCs.
    """
    if n <= 4 * _SUBLANE:
        return n                           # tiny batch: one full-array tile
    rows_cap = min(target_tile_bytes // max(1, c * itemsize),
                   vmem_budget // _bytes_per_row(c, itemsize),
                   max_rows, n)
    rows_cap = max(_SUBLANE, (rows_cap // _SUBLANE) * _SUBLANE)
    num_tiles = max(2, pl.cdiv(n, rows_cap))
    if num_tiles % 2:                      # even tile count balances 2 TCs
        num_tiles += 1
    rows = _SUBLANE * pl.cdiv(pl.cdiv(n, num_tiles), _SUBLANE)
    return min(rows, n)


def mil_loss(logits: jax.Array, targets: jax.Array) -> dict:
    """Pallas equivalent of MILLoss.forward -> dict(cls_loss=...)."""
    n, c = logits.shape
    # NOTE: targets are assumed to be valid class indices in [0, C);
    # ignore_index / per-class weights are not part of the default MILLoss.
    targets2d = targets.astype(jnp.int32).reshape(n, 1)

    vmem_budget, vmem_limit = _chip_vmem_config()
    tile_n = _pick_tile_n(n, c, logits.dtype.itemsize, vmem_budget)
    num_tiles = pl.cdiv(n, tile_n)

    # TODO(synk): for vocab-scale C (>8-16K) also tile C in 128-multiples with
    # an online (m, l) logsumexp across C-tiles; not needed at these sizes.
    # TODO(synk): if a profile shows exposed DMA after tile enlargement, add
    # pipeline_mode=pl.Buffered(3) on the logits BlockSpec.
    partial = pl.pallas_call(
        functools.partial(_mil_ce_kernel, n_total=n),
        grid=(num_tiles,),
        out_shape=jax.ShapeDtypeStruct((1, 128 * num_tiles), jnp.float32),
        in_specs=[
            pl.BlockSpec((tile_n, c), lambda i: (i, 0)),   # logits row tile
            pl.BlockSpec((tile_n, 1), lambda i: (i, 0)),   # matching targets
        ],
        out_specs=pl.BlockSpec((1, 128), lambda i: (0, i)),  # lane-dense partials
        compiler_params=pltpu.CompilerParams(
            dimension_semantics=("parallel",),             # megacore-shardable
            vmem_limit_bytes=vmem_limit,
        ),
    )(logits, targets2d)

    # Each tile wrote its sum to all 128 lanes; /128 is exact (power of two).
    cls_loss = jnp.sum(partial) / jnp.float32(128 * n)
    return dict(cls_loss=cls_loss)


def _reference(logits, targets):
    # pure-JAX reference of CrossEntropyLoss(label_smoothing=0.1, 'mean')
    x = logits.astype(jnp.float32)
    n, c = x.shape
    logp = jax.nn.log_softmax(x, axis=-1)
    onehot = jax.nn.one_hot(targets, c, dtype=jnp.float32)
    q = (1.0 - LABEL_SMOOTHING) * onehot + LABEL_SMOOTHING / c
    return jnp.mean(-jnp.sum(q * logp, axis=-1))


if __name__ == "__main__":
    key = jax.random.PRNGKey(0)
    k1, k2, k3, k4, k5, k6 = jax.random.split(key, 6)

    # 1) small canonical case: batch of 8 bags, 32 classes, f32
    N, C = 8, 32
    logits = jax.random.normal(k1, (N, C), dtype=jnp.float32)
    targets = jax.random.randint(k2, (N,), 0, C, dtype=jnp.int32)
    out = jax.block_until_ready(mil_loss(logits, targets)["cls_loss"])
    ref = _reference(logits, targets)
    assert jnp.allclose(out, ref, atol=1e-5, rtol=1e-5), (out, ref)

    # 2) multi-tile / partial-last-tile / megacore path, bf16 logits
    N2, C2 = 300, 96
    logits2 = jax.random.normal(k3, (N2, C2), dtype=jnp.bfloat16)
    targets2 = jax.random.randint(k4, (N2,), 0, C2, dtype=jnp.int32)
    out2 = jax.block_until_ready(mil_loss(logits2, targets2)["cls_loss"])
    ref2 = _reference(logits2, targets2)
    assert jnp.allclose(out2, ref2, atol=1e-4, rtol=1e-4), (out2, ref2)

    # 3) odd, non-multiple-of-8 shapes -> single full-array tile path
    N3, C3 = 5, 7
    logits3 = jax.random.normal(k5, (N3, C3), dtype=jnp.float32)
    targets3 = jax.random.randint(k6, (N3,), 0, C3, dtype=jnp.int32)
    out3 = jax.block_until_ready(mil_loss(logits3, targets3)["cls_loss"])
    ref3 = _reference(logits3, targets3)
    assert jnp.allclose(out3, ref3, atol=1e-5, rtol=1e-5), (out3, ref3)

    print("KERNEL_OK")
</pallas_src>

<mosaic_0001>
module attributes {stable_mosaic.version = 11 : i64} {
  func.func @_mil_ce_kernel(%arg0: i32, %arg1: memref<8x32xf32, #tpu.memory_space<vmem>>, %arg2: memref<8x1xi32, #tpu.memory_space<vmem>>, %arg3: memref<1x128xf32, #tpu.memory_space<vmem>>) attributes {dimension_semantics = [#tpu.dimension_semantics<parallel>], iteration_bounds = array<i64: 1>, scalar_prefetch = 0 : i64, scratch_operands = 0 : i64, tpu.core_type = #tpu.core_type<tc>, window_params = [{transform_indices = @transform_0, window_bounds = array<i64: 8, 32>}, {transform_indices = @transform_1, window_bounds = array<i64: 8, 1>}, {transform_indices = @transform_2, window_bounds = array<i64: 1, 128>}]} {
    %c0 = arith.constant 0 : index
    %c0_0 = arith.constant 0 : index
    %0 = vector.load %arg1[%c0, %c0_0] : memref<8x32xf32, #tpu.memory_space<vmem>>, vector<8x32xf32>
    %c0_1 = arith.constant 0 : index
    %c0_2 = arith.constant 0 : index
    %1 = vector.load %arg2[%c0_1, %c0_2] : memref<8x1xi32, #tpu.memory_space<vmem>>, vector<8x1xi32>
    %cst = arith.constant dense<0xFF800000> : vector<8xf32>
    %2 = vector.multi_reduction <maximumf>, %0, %cst [1] : vector<8x32xf32> to vector<8xf32>
    %3 = vector.shape_cast %2 : vector<8xf32> to vector<8x1xf32>
    %4 = vector.broadcast %3 : vector<8x1xf32> to vector<8x32xf32>
    %5 = arith.subf %0, %4 : vector<8x32xf32>
    %6 = math.exp %5 : vector<8x32xf32>
    %cst_3 = arith.constant dense<0.000000e+00> : vector<8xf32>
    %7 = vector.multi_reduction <add>, %6, %cst_3 [1] : vector<8x32xf32> to vector<8xf32>
    %8 = vector.shape_cast %7 : vector<8xf32> to vector<8x1xf32>
    %9 = math.log %8 : vector<8x1xf32>
    %10 = tpu.iota {dimensions = array<i32: 1>} : vector<8x32xi32>
    %11 = vector.broadcast %1 : vector<8x1xi32> to vector<8x32xi32>
    %12 = arith.cmpi eq, %10, %11 : vector<8x32xi32>
    %cst_4 = arith.constant 0.903124988 : f32
    %cst_5 = arith.constant 3.125000e-03 : f32
    %13 = vector.broadcast %cst_4 : f32 to vector<8x32xf32>
    %14 = vector.broadcast %cst_5 : f32 to vector<8x32xf32>
    %15 = arith.select %12, %13, %14 : vector<8x32xi1>, vector<8x32xf32>
    %16 = arith.mulf %15, %5 : vector<8x32xf32>
    %cst_6 = arith.constant dense<0.000000e+00> : vector<8xf32>
    %17 = vector.multi_reduction <add>, %16, %cst_6 [1] : vector<8x32xf32> to vector<8xf32>
    %18 = vector.shape_cast %17 : vector<8xf32> to vector<8x1xf32>
    %19 = arith.subf %9, %18 : vector<8x1xf32>
    %20 = tpu.iota {dimensions = array<i32: 0>} : vector<8x1xi32>
    %c8_i32 = arith.constant 8 : i32
    %21 = arith.muli %arg0, %c8_i32 : i32
    %22 = vector.broadcast %21 : i32 to vector<8x1xi32>
    %23 = arith.addi %22, %20 : vector<8x1xi32>
    %c8_i32_7 = arith.constant 8 : i32
    %24 = vector.broadcast %c8_i32_7 : i32 to vector<8x1xi32>
    %25 = arith.cmpi slt, %23, %24 : vector<8x1xi32>
    %cst_8 = arith.constant 0.000000e+00 : f32
    %26 = vector.broadcast %cst_8 : f32 to vector<8x1xf32>
    %27 = arith.select %25, %19, %26 : vector<8x1xi1>, vector<8x1xf32>
    %28 = vector.shape_cast %27 : vector<8x1xf32> to vector<1x8x1xf32>
    %cst_9 = arith.constant dense<0.000000e+00> : vector<1xf32>
    %29 = vector.multi_reduction <add>, %28, %cst_9 [1, 2] : vector<1x8x1xf32> to vector<1xf32>
    %30 = vector.shape_cast %29 : vector<1xf32> to vector<1x1x1xf32>
    %31 = vector.extract %30[0, 0, 0] : f32 from vector<1x1x1xf32>
    %32 = vector.broadcast %31 : f32 to vector<1x128xf32>
    %c0_10 = arith.constant 0 : index
    %c0_11 = arith.constant 0 : index
    %33 = vector.load %arg3[%c0_10, %c0_11] : memref<1x128xf32, #tpu.memory_space<vmem>>, vector<1x128xf32>
    tpu.vector_store %arg3[%c0_10, %c0_11], %32 {strides = array<i32>} : memref<1x128xf32, #tpu.memory_space<vmem>>, vector<1x128xf32>,
    return
  }
  func.func @transform_0(%arg0: i32) -> (i32, i32) {
    %c0_i32 = arith.constant 0 : i32
    %c0_i32_0 = arith.constant 0 : i32
    return %arg0, %c0_i32 : i32, i32
  }
  func.func @transform_1(%arg0: i32) -> (i32, i32) {
    %c0_i32 = arith.constant 0 : i32
    %c0_i32_0 = arith.constant 0 : i32
    return %arg0, %c0_i32 : i32, i32
  }
  func.func @transform_2(%arg0: i32) -> (i32, i32) {
    %c0_i32 = arith.constant 0 : i32
    %c0_i32_0 = arith.constant 0 : i32
    return %c0_i32, %arg0 : i32, i32
  }
}

</mosaic_0001>

<llo_original>
// kernel: tpu_custom_call.1
$region0: #{tpu_custom_call.1}
  #allocation0 [shape = 'u32[]', space=smem, size = 0x4, offset = 0x4, fixed_abs, tag = 'smem constant byte address 0x4 - core index']
  #allocation1 [shape = 'u32[144,128]{1,0:T(1,128)}', space=vmem, size = 0x12000, scoped, tag = 'internal scratch']
  %s0 = inlined_call_operand.vmem [shape: f32[8,32], index: 0, kind: input, shape index: {}]
  %s1 = inlined_call_operand.vmem [shape: s32[8,1], index: 1, kind: input, shape index: {}]
  %s2 = inlined_call_operand.hbm [shape: f32[1,128], index: 2, kind: output, shape index: {}]
  %s3 = sld [smem:[#allocation0]]
  $region18: #{tpu_custom_call.1} parent=0
    _
  %s5 = ssub.s32 1, %s3
  %s6 = scalar_select 0, %s5, %s3
  $region1: #{tpu_custom_call.1} parent=0
    #allocation2 [shape = 'u8[512]{0}', space=vmem, size = 0x400, scoped, tag = 'output window, operand 0, single buffered']
    #allocation3 [shape = 's32[1]{0}', space=sflag, size = 0x4, scoped, tag = 'scoped memory for tpu_custom_call.1']
    %7 = vsyncpa [#allocation3], 0
    // Predicated region
    $region2: #{tpu_custom_call.1} parent=1 // pred_check
      _
    $region3: #{tpu_custom_call.1} parent=1 // pred_check_branch
      %9 = sbr.rel (0) target = $region5
    $region4: #{tpu_custom_call.1} parent=1 // pred_region
      _
    $region5: #{tpu_custom_call.1} parent=1 // pred_fallthru
      _
    // Predicated region
    $region6: #{tpu_custom_call.1} parent=1 // pred_check
      _
    $region7: #{tpu_custom_call.1} parent=1 // pred_check_branch
      %11 = sbr.rel (0) target = $region9
    $region8: #{tpu_custom_call.1} parent=1 // pred_region
      _
    $region9: #{tpu_custom_call.1} parent=1 // pred_fallthru
      _
    %v12 = vld [vmem:[%s0] sm:$0xff]
    %v13 = vld [vmem:[%s1] sm:$0xff]
    %vm14 = vcmask 261120
    %v15 = vsel %vm14, %v12, -inf
    %16 = vmax.xlane.f32.xlu0 %v15
    %v17 = vpop.xlane.xlu0 %16
    %v18 = vsub.f32 %v12, %v17
    %v19 = vmul.f32 %v18, 1.442695
    %v20 = vpow.pop %v19
    %v21 = vsel %vm14, %v20, 0.0
    %22 = vadd.xlane.f32.xlu0 %v21
    %v23 = vpop.xlane.xlu0 %22
    %v24 = vlog2.pop %v23
    %v25 = vmul.f32 %v24, 0.6931472
    %v26 = vlaneseq
    %v27 = vand.u32 %v26, 127
    %28 = vset.pattern.permute.xlu0 0
    %29 = vperm.xlu0 %28, %v13
    %v30 = vpop.permute.xlu0 %29
    %vm31 = vcmp.eq.s32.totalorder %v27, %v30
    %v32 = vsel %vm31, 0.903125, 0.003125
    %v33 = vmul.f32 %v32, %v18
    %v34 = vsel %vm14, %v33, 0.0
    %35 = vadd.xlane.f32.xlu0 %v34
    %v36 = vpop.xlane.xlu0 %35
    %v37 = vsub.f32 %v25, %v36
    %v38 = vlaneseq
    %v39 = vshrl.u32 %v38, 7
    %s40 = smul.u32 0, 8
    %v41 = vstv %s40
    %v42 = vadd.s32 %v41, %v39
    %vm43 = vcmp.lt.s32.totalorder %v42, 8
    %v44 = vsel %vm43, %v37, 0.0
    %vm45 = vcmask 7168
    %v46 = vsel %vm45, %v44, 0.0
    %47 = vadd.xlane.f32.xlu0 %v46
    %v48 = vpop.xlane.xlu0 %47
    %v49 = vrot.slane %v48, 4
    %v50 = vadd.f32 %v48, %v49
    %v51 = vrot.slane %v50, 2
    %v52 = vadd.f32 %v50, %v51
    %v53 = vrot.slane %v52, 1
    %v54 = vadd.f32 %v52, %v53
    %s55 = vtos %v54
    %v56 = vstv %s55
    %57 = vst [vmem:[#allocation2] sm:$0x1] %v56
    // Predicated region
    $region10: #{tpu_custom_call.1} parent=1 // pred_check
      _
    $region11: #{tpu_custom_call.1} parent=1 // pred_check_branch
      %59 = sbr.rel (0) target = $region13
    $region12: #{tpu_custom_call.1} parent=1 // pred_region
      %s61 = ssub.s32 16, 16
      %62 = vsyncadd [#allocation3], %s61
      %s64 = sshll.u32 [#allocation2], 4
      %s65 = int_to_ptr.vmem [resolvable:$true] %s64
      %67 = dma.vmem_to_hbm [thread:$0]  %s65, 16, %s2, [#allocation3]
    $region13: #{tpu_custom_call.1} parent=1 // pred_fallthru
      _
    // Predicated region
    $region14: #{tpu_custom_call.1} parent=1 // pred_check
      _
    $region15: #{tpu_custom_call.1} parent=1 // pred_check_branch
      %69 = sbr.rel (0) target = $region17
    $region16: #{tpu_custom_call.1} parent=1 // pred_region
      %70 = dma.done [#allocation3], 16
    $region17: #{tpu_custom_call.1} parent=1 // pred_fallthru
      _
    %71 = vsyncpa [#allocation3], 1

</llo_original>
